<compile_context>
chip_gen: v6e
topology: v6e:2x2x1
jax: 0.10.0
libtpu: 0.0.40
codegen_flags: <defaults>
</compile_context>

<pallas_src>
import jax
import jax.numpy as jnp
from jax import lax
from jax.experimental import pallas as pl
from jax.experimental.pallas import tpu as pltpu


# ---------------------------------------------------------------------------
# Kernels: one fused MXU matmul per (batch, HW-tile) grid step.
# ---------------------------------------------------------------------------
def _proj_kernel(u_ref, w_ref, o_ref):
    # u_ref: (1, 9*C_in, T) im2col tile; w_ref: (C_out, 9*C_in); o_ref: (1, C_out, T)
    o_ref[0] = jnp.dot(
        w_ref[...], u_ref[0], preferred_element_type=jnp.float32
    ).astype(o_ref.dtype)


def _proj_bias_kernel(u_ref, w_ref, b_ref, o_ref):
    acc = jnp.dot(w_ref[...], u_ref[0], preferred_element_type=jnp.float32)
    o_ref[0] = (acc + b_ref[...].astype(jnp.float32)).astype(o_ref.dtype)


# ---------------------------------------------------------------------------
# Wrapper
# ---------------------------------------------------------------------------
def _choose_hw_tile(hw, max_tile):
    """Largest multiple of 128 that divides hw and is <= max_tile (else hw)."""
    if hw % 128 != 0:
        # Uncommon image sizes: fall back to a single full-width tile
        # (block == full dim is always legal).
        return hw
    t = min(max_tile - (max_tile % 128), hw)
    while t >= 128:
        if hw % t == 0:
            return t
        t -= 128
    return hw


def overlap_patch_embed(x_nchw, weight_oihw, bias=None, *, max_tile_hw=2048):
    """x_nchw: (B, C_in, H, W). weight_oihw: (C_out, C_in, 3, 3) (torch layout).
    bias: optional (C_out,). Returns (B, C_out, H, W) == Conv2d(3x3, s=1, p=1)(x)."""
    B, C_in, H, W = x_nchw.shape
    C_out = weight_oihw.shape[0]
    assert weight_oihw.shape == (C_out, C_in, 3, 3)

    HW = H * W
    K = 9 * C_in
    T = _choose_hw_tile(HW, max_tile_hw)
    n_tiles = HW // T

    # ---- layout plumbing + im2col (wrapper-side XLA; output stays NCHW-flat) ----
    # Flat zero-pad of (W+1) on each side handles the vertical (dy) taps; the two
    # column masks kill the horizontal wrap-around for dx = ±1.
    x_flat = x_nchw.reshape(B, C_in, HW)
    x_pad = jnp.pad(x_flat, ((0, 0), (0, 0), (W + 1, W + 1)))
    cols = (jnp.arange(HW, dtype=jnp.int32) % W)[None, None, :]

    taps = []
    for dy in (-1, 0, 1):
        for dx in (-1, 0, 1):
            s = (dy + 1) * W + (dx + 1)            # static shift in [0, 2W+2]
            win = x_pad[:, :, s:s + HW]            # (B, C_in, HW)
            if dx == -1:
                win = jnp.where(cols != 0, win, 0)
            elif dx == 1:
                win = jnp.where(cols != (W - 1), win, 0)
            taps.append(win)
    unfold = jnp.concatenate(taps, axis=1)         # (B, 9*C_in, HW)

    # (C_out, C_in, 3, 3) -> (C_out, 3, 3, C_in) -> (C_out, 9*C_in); column t*C_in+c.
    w_mat = jnp.transpose(weight_oihw, (0, 2, 3, 1)).reshape(C_out, K)

    in_specs = [
        pl.BlockSpec((1, K, T), lambda b, j: (b, 0, j)),      # im2col tile
        pl.BlockSpec((C_out, K), lambda b, j: (0, 0)),        # fused weights (resident)
    ]
    args = [unfold, w_mat]
    if bias is not None:
        in_specs.append(pl.BlockSpec((C_out, 1), lambda b, j: (0, 0)))
        args.append(bias.reshape(C_out, 1))
        kernel = _proj_bias_kernel
    else:
        kernel = _proj_kernel

    out_flat = pl.pallas_call(
        kernel,
        out_shape=jax.ShapeDtypeStruct((B, C_out, HW), x_nchw.dtype),
        grid=(B, n_tiles),
        in_specs=in_specs,
        out_specs=pl.BlockSpec((1, C_out, T), lambda b, j: (b, 0, j)),
        compiler_params=pltpu.CompilerParams(
            dimension_semantics=("parallel", "parallel")),
    )(*args)

    # (B, C_out, H*W) -> (B, C_out, H, W): pure reshape, no transpose.
    return out_flat.reshape(B, C_out, H, W)


# ---------------------------------------------------------------------------
# Reference + self-check
# ---------------------------------------------------------------------------
def _reference(x_nchw, weight_oihw, bias=None):
    out = lax.conv_general_dilated(
        x_nchw, weight_oihw,
        window_strides=(1, 1),
        padding=((1, 1), (1, 1)),
        dimension_numbers=("NCHW", "OIHW", "NCHW"),
        precision=lax.Precision.HIGHEST)
    if bias is not None:
        out = out + bias.reshape(1, -1, 1, 1)
    return out


if __name__ == "__main__":
    # Small shapes consistent with the module defaults: in_c=3, embed_dim=48.
    B, C_in, H, W = 2, 3, 16, 16
    C_out = 48

    key = jax.random.PRNGKey(0)
    kx, kw, kb = jax.random.split(key, 3)

    x = jax.random.normal(kx, (B, C_in, H, W), dtype=jnp.float32)
    bound = 1.0 / (C_in * 9) ** 0.5
    w = jax.random.uniform(kw, (C_out, C_in, 3, 3),
                           minval=-bound, maxval=bound, dtype=jnp.float32)
    b = jax.random.uniform(kb, (C_out,),
                           minval=-bound, maxval=bound, dtype=jnp.float32)

    # Module default path: bias=False.
    out = jax.block_until_ready(overlap_patch_embed(x, w))
    ref = _reference(x, w)
    assert out.shape == (B, C_out, H, W)
    assert jnp.allclose(out, ref, atol=2e-4, rtol=2e-4), "mismatch vs reference"

    # Optional bias path.
    out_b = jax.block_until_ready(overlap_patch_embed(x, w, b))
    ref_b = _reference(x, w, b)
    assert jnp.allclose(out_b, ref_b, atol=2e-4, rtol=2e-4), "bias mismatch vs reference"

    print("KERNEL_OK")
</pallas_src>

<mosaic_0001>
module attributes {stable_mosaic.version = 11 : i64} {
  func.func @_proj_kernel(%arg0: i32, %arg1: i32, %arg2: memref<1x27x256xf32, #tpu.memory_space<vmem>>, %arg3: memref<48x27xf32, #tpu.memory_space<vmem>>, %arg4: memref<1x48x256xf32, #tpu.memory_space<vmem>>) attributes {dimension_semantics = [#tpu.dimension_semantics<parallel>, #tpu.dimension_semantics<parallel>], iteration_bounds = array<i64: 2, 1>, scalar_prefetch = 0 : i64, scratch_operands = 0 : i64, tpu.core_type = #tpu.core_type<tc>, window_params = [{transform_indices = @transform_0, window_bounds = array<i64: 1, 27, 256>}, {pipeline_mode = #tpu.pipeline_mode<synchronous>, transform_indices = @transform_1, window_bounds = array<i64: 48, 27>}, {transform_indices = @transform_2, window_bounds = array<i64: 1, 48, 256>}]} {
    %c0 = arith.constant 0 : index
    %c0_0 = arith.constant 0 : index
    %0 = vector.load %arg3[%c0, %c0_0] : memref<48x27xf32, #tpu.memory_space<vmem>>, vector<48x27xf32>
    %c0_1 = arith.constant 0 : index
    %c0_2 = arith.constant 0 : index
    %c0_3 = arith.constant 0 : index
    %1 = vector.load %arg2[%c0_1, %c0_2, %c0_3] : memref<1x27x256xf32, #tpu.memory_space<vmem>>, vector<1x27x256xf32>
    %2 = vector.shape_cast %1 : vector<1x27x256xf32> to vector<27x256xf32>
    %cst = arith.constant dense<0.000000e+00> : vector<48x256xf32>
    %3 = tpu.matmul %0, %2, %cst {dimension_numbers = #tpu.dot_dimension_numbers<[1], [0], [0], [1], [0, 0, 1, 1], [], []>} : vector<48x27xf32>, vector<27x256xf32>, vector<48x256xf32> -> vector<48x256xf32>
    %c0_4 = arith.constant 0 : index
    %c0_5 = arith.constant 0 : index
    %c0_6 = arith.constant 0 : index
    %4 = vector.load %arg4[%c0_4, %c0_5, %c0_6] : memref<1x48x256xf32, #tpu.memory_space<vmem>>, vector<1x48x256xf32>
    %5 = vector.shape_cast %4 : vector<1x48x256xf32> to vector<48x256xf32>
    %6 = vector.shape_cast %3 : vector<48x256xf32> to vector<1x48x256xf32>
    tpu.vector_store %arg4[%c0_4, %c0_5, %c0_6], %6 {strides = array<i32>} : memref<1x48x256xf32, #tpu.memory_space<vmem>>, vector<1x48x256xf32>,
    return
  }
  func.func @transform_0(%arg0: i32, %arg1: i32) -> (i32, i32, i32) {
    %c0_i32 = arith.constant 0 : i32
    %c0_i32_0 = arith.constant 0 : i32
    return %arg0, %c0_i32, %arg1 : i32, i32, i32
  }
  func.func @transform_1(%arg0: i32, %arg1: i32) -> (i32, i32) {
    %c0_i32 = arith.constant 0 : i32
    %c0_i32_0 = arith.constant 0 : i32
    %c0_i32_1 = arith.constant 0 : i32
    return %c0_i32, %c0_i32_0 : i32, i32
  }
  func.func @transform_2(%arg0: i32, %arg1: i32) -> (i32, i32, i32) {
    %c0_i32 = arith.constant 0 : i32
    %c0_i32_0 = arith.constant 0 : i32
    return %arg0, %c0_i32, %arg1 : i32, i32, i32
  }
}

</mosaic_0001>

<llo_original>
// kernel: tpu_custom_call.1
$region0: #{tpu_custom_call.1}
  #allocation0 [shape = 'u32[]', space=smem, size = 0x4, offset = 0x4, fixed_abs, tag = 'smem constant byte address 0x4 - core index']
  #allocation1 [shape = 'u32[144,128]{1,0:T(1,128)}', space=vmem, size = 0x12000, scoped, tag = 'internal scratch']
  %s0 = inlined_call_operand.vmem [shape: f32[2,27,256], index: 0, kind: input, shape index: {}]
  %s1 = inlined_call_operand.vmem [shape: f32[48,27], index: 1, kind: input, shape index: {}]
  %s2 = inlined_call_operand.hbm [shape: f32[2,48,256], index: 2, kind: output, shape index: {}]
  %s3 = sld [smem:[#allocation0]]
  $region41: #{tpu_custom_call.1} parent=0
    _
  %s5 = ssub.s32 1, %s3
  %s6 = scalar_select 0, %s5, %s3
  $region1: #{tpu_custom_call.1} parent=0
    #allocation2 [shape = 'u8[98304]{0}', space=vmem, size = 0x18000, scoped, tag = 'output window, operand 0']
    #allocation3 [shape = 's32[2]{0}', space=sflag, size = 0x8, scoped, tag = 'scoped memory for tpu_custom_call.1']
    %7 = vsyncpa [#allocation3], 0
    %s8 = scalar_lea.sflag [#allocation3], 1
    %9 = vsyncpa %s8, 0
    loop: start=0, step=1, limit=4
    $region2: #{tpu_custom_call.1} parent=1 // loop_pre_header
      _
    $region3: #{tpu_custom_call.1} parent=1 // loop_header
      %s11 = sphi 0, %s15
      %p12 = scmp.ge.s32.totalorder %s11, 4
      %s18 = sphi 0, %s30
      %s19 = sphi 0, %s26
      %s20 = sphi 0, %s18
      %s21 = sphi 0, %s19
      %s22 = sphi 0, %s20
      %s23 = sphi 0, %s21
      %s35 = sphi 0, %s37
      %s38 = sphi 0, %s35
      %s39 = sphi 0, %s38
      %s55 = sphi 0, %s39
      %s59 = sphi 0, %s59
      %s61 = sphi 0, %s59
      %s62 = sphi 0, %s61
      %s76 = sphi 0, %s62
      %s84 = sphi 0, %s86
      %s87 = sphi 0, %s84
      %s88 = sphi 0, %s87
      %s104 = sphi 0, %s88
    $region4: #{tpu_custom_call.1} parent=1 // loop_header_branch
      %14 = sbr.rel (%p12) target = $region8
    $region5: #{tpu_custom_call.1} parent=1 // loop_body
      %s16 = ssub.s32 %s11, 1
      %s17 = ssub.s32 %s11, 2
      %s24 = sadd.s32 1, %s19
      %p25 = scmp.ge.s32.totalorder %s24, 1
      %s26 = scalar_select %p25, 0, %s24
      %s27 = sadd.s32 1, %s18
      %s28 = scalar_select %p25, %s27, %s18
      %p29 = scmp.ge.s32.totalorder %s28, 2
      %s30 = scalar_select %p29, 0, %s28
      %s31 = ssub.s32 %s18, %s30
      %s32 = ssub.s32 %s19, %s26
      %s33 = sor.u32 %s31, %s32
      %p34 = scmp.eq.s32.totalorder %s33, 0
      %s36 = sadd.s32 %s35, 1
      %s37 = scalar_select %p34, %s35, %s36
      %p40 = pneg %p34
      %p41 = scmp.eq.s32.totalorder %s11, 1
      %p42 = por %p40, %p41
      %p43 = scmp.ne.s32.totalorder %s35, %s38
      %p44 = scmp.eq.s32.totalorder %s11, 0
      %p45 = por %p43, %p44
      %p46 = scmp.ne.s32.totalorder %s35, %s38
      %p47 = scmp.eq.s32.totalorder %s16, 1
      %p48 = por %p46, %p47
      %p49 = scmp.ne.s32.totalorder %s38, %s39
      %p50 = scmp.eq.s32.totalorder %s16, 0
      %p51 = por %p49, %p50
      %p52 = scmp.ne.s32.totalorder %s38, %s39
      %p53 = scmp.eq.s32.totalorder %s17, 1
      %p54 = por %p52, %p53
      %p56 = scmp.ne.s32.totalorder %s39, %s55
      %p57 = scmp.eq.s32.totalorder %s17, 0
      %p58 = por %p56, %p57
      %s60 = sadd.s32 %s59, 1
      %p63 = scmp.eq.s32.totalorder %s11, 1
      %p64 = scmp.ne.s32.totalorder %s59, %s61
      %p65 = scmp.eq.s32.totalorder %s11, 0
      %p66 = por %p64, %p65
      %p67 = scmp.ne.s32.totalorder %s59, %s61
      %p68 = scmp.eq.s32.totalorder %s16, 1
      %p69 = por %p67, %p68
      %p70 = scmp.ne.s32.totalorder %s61, %s62
      %p71 = scmp.eq.s32.totalorder %s16, 0
      %p72 = por %p70, %p71
      %p73 = scmp.ne.s32.totalorder %s61, %s62
      %p74 = scmp.eq.s32.totalorder %s17, 1
      %p75 = por %p73, %p74
      %p77 = scmp.ne.s32.totalorder %s62, %s76
      %p78 = scmp.eq.s32.totalorder %s17, 0
      %p79 = por %p77, %p78
      %s80 = ssub.s32 %s18, %s30
      %s81 = ssub.s32 %s19, %s26
      %s82 = sor.u32 %s80, %s81
      %p83 = scmp.eq.s32.totalorder %s82, 0
      %s85 = sadd.s32 %s84, 1
      %s86 = scalar_select %p83, %s84, %s85
      %p89 = pneg %p83
      %p90 = scmp.eq.s32.totalorder %s11, 1
      %p91 = por %p89, %p90
      %p92 = scmp.ne.s32.totalorder %s84, %s87
      %p93 = scmp.eq.s32.totalorder %s11, 0
      %p94 = por %p92, %p93
      %p95 = scmp.ne.s32.totalorder %s84, %s87
      %p96 = scmp.eq.s32.totalorder %s16, 1
      %p97 = por %p95, %p96
      %p98 = scmp.ne.s32.totalorder %s87, %s88
      %p99 = scmp.eq.s32.totalorder %s16, 0
      %p100 = por %p98, %p99
      %p101 = scmp.ne.s32.totalorder %s87, %s88
      %p102 = scmp.eq.s32.totalorder %s17, 1
      %p103 = por %p101, %p102
      %p105 = scmp.ne.s32.totalorder %s88, %s104
      %p106 = scmp.eq.s32.totalorder %s17, 0
      %p107 = por %p105, %p106
      %p108 = scmp.le.s32.totalorder 1, %s11
      %p109 = scmp.lt.s32.totalorder %s11, 3
      %p110 = pnand %p108, %p109
      %p111 = pneg %p110
      // Predicated region
      $region9: #{tpu_custom_call.1} parent=5 // pred_check
        _
      $region10: #{tpu_custom_call.1} parent=5 // pred_check_branch
        %113 = sbr.rel (%p110) target = $region12
      $region11: #{tpu_custom_call.1} parent=5 // pred_region
        %s114 = ssub.s32 %s11, 1
        // Predicated region
        $region13: #{tpu_custom_call.1} parent=11 // pred_check
          %p115 = pneg %p72
        $region14: #{tpu_custom_call.1} parent=11 // pred_check_branch
          %117 = sbr.rel (%p115) target = $region16
        $region15: #{tpu_custom_call.1} parent=11 // pred_region
          _
        $region16: #{tpu_custom_call.1} parent=11 // pred_fallthru
          _
      $region12: #{tpu_custom_call.1} parent=5 // pred_fallthru
        _
      %p118 = scmp.lt.s32.totalorder %s11, 2
      // Predicated region
      $region17: #{tpu_custom_call.1} parent=5 // pred_check
        %p119 = pneg %p118
      $region18: #{tpu_custom_call.1} parent=5 // pred_check_branch
        %121 = sbr.rel (%p119) target = $region20
      $region19: #{tpu_custom_call.1} parent=5 // pred_region
        // Predicated region
        $region21: #{tpu_custom_call.1} parent=19 // pred_check
          %p122 = pneg %p45
        $region22: #{tpu_custom_call.1} parent=19 // pred_check_branch
          %124 = sbr.rel (%p122) target = $region24
        $region23: #{tpu_custom_call.1} parent=19 // pred_region
          %s125 = smul.u32 2, %s19
          %p126 = scmp.lt.s32.totalorder %s18, 1
          %s127 = scalar_select %p126, %s18, 1
          %p128 = scmp.lt.s32.totalorder %s125, 1
          %s129 = scalar_select %p128, %s125, 1
          %s130 = smul.addr %s127, 8
          %s131 = sadd.s32 %s129, %s130
          %s132 = smul.addr %s131, 8
          %s133 = scalar_lea.vmem %s0, %s132
          %s134 = smul.u32 2, %s19
        $region24: #{tpu_custom_call.1} parent=19 // pred_fallthru
          _
      $region20: #{tpu_custom_call.1} parent=5 // pred_fallthru
        _
      %p135 = scmp.le.s32.totalorder 1, %s11
      %p136 = scmp.lt.s32.totalorder %s11, 3
      %p137 = pnand %p135, %p136
      %p138 = pneg %p137
      // Predicated region
      $region25: #{tpu_custom_call.1} parent=5 // pred_check
        _
      $region26: #{tpu_custom_call.1} parent=5 // pred_check_branch
        %140 = sbr.rel (%p137) target = $region28
      $region27: #{tpu_custom_call.1} parent=5 // pred_region
        %s141 = ssub.s32 %s11, 1
        %s142 = smul.u32 2, %s21
        %p143 = scmp.lt.s32.totalorder %s20, 1
        %s144 = scalar_select %p143, %s20, 1
        %p145 = scmp.lt.s32.totalorder %s142, 1
        %s146 = scalar_select %p145, %s142, 1
        %s147 = smul.addr %s144, 8
        %s148 = sadd.s32 %s146, %s147
        %s149 = smul.addr %s148, 8
        %s150 = scalar_lea.vmem %s0, %s149
        %p151 = pneg %p51
        %p152 = pneg %p48
        %p153 = pneg %p72
        %p154 = pneg %p69
        %p155 = pneg %p100
        %p156 = pneg %p97
        %s157 = sand.u32 %s87, 1
        %s158 = scalar_lea.sflag [#allocation3], %s157
        %s159 = sand.u32 %s87, 1
        %s160 = smul.addr %s159, 96
        %s161 = scalar_lea.vmem [#allocation2], %s160
        %s162 = smul.u32 2, %s21
        %p163 = scmp.lt.s32.totalorder %s20, 1
        %s164 = scalar_select %p163, %s20, 1
        %p165 = scmp.lt.s32.totalorder %s162, 1
        %s166 = scalar_select %p165, %s162, 1
        %s167 = smul.addr %s164, 8
        %s168 = sadd.s32 %s166, %s167
        %s169 = smul.addr %s168, 8
        %s170 = scalar_lea.vmem %s0, %s169
        %s171 = smul.u32 2, %s21
        %s172 = smul.u32 2, %s21
        %v173 = vld [vmem:[%s1] sm:$0xff]
        %v174 = vld [vmem:[%s1 + $0x8] sm:$0xff]
        %v175 = vld [vmem:[%s1 + $0x10] sm:$0xff]
        %v176 = vld [vmem:[%s1 + $0x18] sm:$0xff]
        %v177 = vld [vmem:[%s1 + $0x20] sm:$0xff]
        %v178 = vld [vmem:[%s1 + $0x28] sm:$0xff]
        %v179 = vld [vmem:[%s170] sm:$0xff]
        %v180 = vld [vmem:[%s170 + $0x8] sm:$0xff]
        %v181 = vld [vmem:[%s170 + $0x10] sm:$0xff]
        %v182 = vld [vmem:[%s170 + $0x18] sm:$0xff]
        %v183 = vld [vmem:[%s170 + $0x20] sm:$0xff]
        %v184 = vld [vmem:[%s170 + $0x28] sm:$0xff]
        %v185 = vld [vmem:[%s170 + $0x30] sm:$0x7]
        %v186 = vld [vmem:[%s170 + $0x38] sm:$0x7]
        %vm187 = vcmask 220160
        %v189 = vsel %vm187, %v173, 0
        %v192 = vsel %vm187, %v174, 0
        %v195 = vsel %vm187, %v175, 0
        %v198 = vsel %vm187, %v176, 0
        %v201 = vsel %vm187, %v177, 0
        %v204 = vsel %vm187, %v178, 0
        %vm206 = vcmask 1042432
        %v208 = vsel %vm206, %v185, 0
        %v211 = vsel %vm206, %v186, 0
        %213 = vmatprep.subr.mxu0 0.0
        %214 = vmatpush1.msra.mxu0 0.0
        %215 = vmatprep.subr.mxu0 0.0
        %216 = vmatpush1.msra.mxu0 0.0
        %217 = vmatprep.subr.mxu0 0.0
        %218 = vmatpush1.msra.mxu0 0.0
        %219 = vmatprep.subr.mxu0 0.0
        %220 = vmatpush1.msra.mxu0 0.0
        %221 = vmatprep.subr.mxu0 0.0
        %222 = vmatpush1.msra.mxu0 0.0
        %223 = vmatprep.subr.mxu0 0.0
        %224 = vmatpush1.msra.mxu0 0.0
        %225 = vmatprep.subr.mxu0 0.0
        %226 = vmatpush1.msra.mxu0 0.0
        %227 = vmatprep.subr.mxu0 0.0
        %228 = vmatpush1.msra.mxu0 0.0
        %229 = vmatprep.subr.mxu0 0.0
        %230 = vmatpush1.msra.mxu0 0.0
        %231 = vmatprep.subr.mxu0 0.0
        %232 = vmatpush1.msra.mxu0 0.0
        %233 = vmatprep.subr.mxu0 0.0
        %234 = vmatpush1.msra.mxu0 0.0
        %235 = vmatprep.subr.mxu0 0.0
        %236 = vmatpush1.msra.mxu0 0.0
        %237 = vmatprep.subr.mxu0 %v211
        %238 = vmatpush1.msra.mxu0 %v208
        %239 = vmatprep.subr.mxu0 %v184
        %240 = vmatpush1.msra.mxu0 %v183
        %241 = vmatprep.subr.mxu0 %v182
        %242 = vmatpush1.msra.mxu0 %v181
        %243 = vmatprep.subr.mxu0 %v180
        %244 = vmatpush1.msra.mxu0 %v179
        %245 = vmatprep.subr.mxu0 0.0
        %246 = vmatpush2.msra.mxu0 0.0
        %247 = vmatprep.subr.mxu0 0.0
        %248 = vmatpush2.msra.mxu0 0.0
        %249 = vmatprep.subr.mxu0 0.0
        %250 = vmatpush2.msra.mxu0 0.0
        %251 = vmatprep.subr.mxu0 0.0
        %252 = vmatpush2.msra.mxu0 0.0
        %253 = vmatprep.subr.mxu0 0.0
        %254 = vmatpush2.msra.mxu0 0.0
        %255 = vmatprep.subr.mxu0 0.0
        %256 = vmatpush2.msra.mxu0 0.0
        %257 = vmatprep.subr.mxu0 0.0
        %258 = vmatpush2.msra.mxu0 0.0
        %259 = vmatprep.subr.mxu0 0.0
        %260 = vmatpush2.msra.mxu0 0.0
        %261 = vmatprep.subr.mxu0 0.0
        %262 = vmatpush2.msra.mxu0 0.0
        %263 = vmatprep.subr.mxu0 0.0
        %264 = vmatpush2.msra.mxu0 0.0
        %265 = vmatprep.subr.mxu0 0.0
        %266 = vmatpush2.msra.mxu0 0.0
        %267 = vmatprep.subr.mxu0 0.0
        %268 = vmatpush2.msra.mxu0 0.0
        %269 = vmatprep.subr.mxu0 0.0
        %270 = vmatpush2.msra.mxu0 0.0
        %271 = vmatprep.subr.mxu0 0.0
        %272 = vmatpush2.msra.mxu0 0.0
        %273 = vmatprep.subr.mxu0 0.0
        %274 = vmatpush2.msra.mxu0 0.0
        %275 = vmatprep.subr.mxu0 0.0
        %276 = vmatpush2.msra.mxu0 0.0
        %277 = vmatprep.mubr.f32.mxu0 0.0
        %278 = vmatmul.mubr.f32.gmra.mxu0 %v189
        %v279 = vpop.f32.mrf.mxu0
        %v280 = vadd.f32 0.0, %v279
        %v281 = vpop.f32.mrf.mxu0
        %v282 = vadd.f32 0.0, %v281
        %283 = vmatprep.mubr.f32.mxu0 0.0
        %284 = vmatmul.mubr.f32.gmra.mxu0 %v192
        %v285 = vpop.f32.mrf.mxu0
        %v286 = vadd.f32 0.0, %v285
        %v287 = vpop.f32.mrf.mxu0
        %v288 = vadd.f32 0.0, %v287
        %289 = vmatprep.mubr.f32.mxu0 0.0
        %290 = vmatmul.mubr.f32.gmra.mxu0 %v195
        %v291 = vpop.f32.mrf.mxu0
        %v292 = vadd.f32 0.0, %v291
        %v293 = vpop.f32.mrf.mxu0
        %v294 = vadd.f32 0.0, %v293
        %295 = vmatprep.mubr.f32.mxu0 0.0
        %296 = vmatmul.mubr.f32.gmra.mxu0 %v198
        %v297 = vpop.f32.mrf.mxu0
        %v298 = vadd.f32 0.0, %v297
        %v299 = vpop.f32.mrf.mxu0
        %v300 = vadd.f32 0.0, %v299
        %301 = vmatprep.mubr.f32.mxu0 0.0
        %302 = vmatmul.mubr.f32.gmra.mxu0 %v201
        %v303 = vpop.f32.mrf.mxu0
        %v304 = vadd.f32 0.0, %v303
        %v305 = vpop.f32.mrf.mxu0
        %v306 = vadd.f32 0.0, %v305
        %307 = vmatprep.mubr.f32.mxu0 0.0
        %308 = vmatmul.mubr.f32.gmra.mxu0 %v204
        %v309 = vpop.f32.mrf.mxu0
        %v310 = vadd.f32 0.0, %v309
        %v311 = vpop.f32.mrf.mxu0
        %v312 = vadd.f32 0.0, %v311
        %313 = vdwg.mxu0
        %314 = vst [vmem:[%s161] sm:$0xff] %v280
        %315 = vst [vmem:[%s161 + $0x8] sm:$0xff] %v282
        %316 = vst [vmem:[%s161 + $0x10] sm:$0xff] %v286
        %317 = vst [vmem:[%s161 + $0x18] sm:$0xff] %v288
        %318 = vst [vmem:[%s161 + $0x20] sm:$0xff] %v292
        %319 = vst [vmem:[%s161 + $0x28] sm:$0xff] %v294
        %320 = vst [vmem:[%s161 + $0x30] sm:$0xff] %v298
        %321 = vst [vmem:[%s161 + $0x38] sm:$0xff] %v300
        %322 = vst [vmem:[%s161 + $0x40] sm:$0xff] %v304
        %323 = vst [vmem:[%s161 + $0x48] sm:$0xff] %v306
        %324 = vst [vmem:[%s161 + $0x50] sm:$0xff] %v310
        %325 = vst [vmem:[%s161 + $0x58] sm:$0xff] %v312
        %s326 = sand.u32 %s87, 1
        %s327 = scalar_lea.sflag [#allocation3], %s326
        %s328 = sand.u32 %s87, 1
        %s329 = smul.addr %s328, 96
        %s330 = scalar_lea.vmem [#allocation2], %s329
        // Predicated region
        $region29: #{tpu_custom_call.1} parent=27 // pred_check
          %p331 = pneg %p97
        $region30: #{tpu_custom_call.1} parent=27 // pred_check_branch
          %333 = sbr.rel (%p331) target = $region32
        $region31: #{tpu_custom_call.1} parent=27 // pred_region
          %s334 = smul.u32 2, %s21
          %s336 = ssub.s32 1536, 1536
          %337 = vsyncadd %s327, %s336
          %s338 = smul.addr %s20, 12
          %s339 = sadd.s32 %s334, %s338
          %s340 = smul.addr %s339, 128
          %s341 = scalar_lea.hbm %s2, %s340
          %s342 = sshll.u32 %s330, 4
          %s343 = int_to_ptr.vmem [resolvable:$true] %s342
          %348 = dma.vmem_to_hbm [thread:$0]  %s343, 1536, %s341, %s327, 256, 256, 16
        $region32: #{tpu_custom_call.1} parent=27 // pred_fallthru
          _
      $region28: #{tpu_custom_call.1} parent=5 // pred_fallthru
        _
      %p349 = scmp.le.s32.totalorder 2, %s11
      // Predicated region
      $region33: #{tpu_custom_call.1} parent=5 // pred_check
        %p350 = pneg %p349
      $region34: #{tpu_custom_call.1} parent=5 // pred_check_branch
        %352 = sbr.rel (%p350) target = $region36
      $region35: #{tpu_custom_call.1} parent=5 // pred_region
        %s353 = ssub.s32 %s11, 2
        // Predicated region
        $region37: #{tpu_custom_call.1} parent=35 // pred_check
          %p354 = pneg %p103
        $region38: #{tpu_custom_call.1} parent=35 // pred_check_branch
          %356 = sbr.rel (%p354) target = $region40
        $region39: #{tpu_custom_call.1} parent=35 // pred_region
          %s357 = sand.u32 %s88, 1
          %s358 = scalar_lea.sflag [#allocation3], %s357
          %s359 = sand.u32 %s88, 1
          %s360 = smul.addr %s359, 96
          %s361 = scalar_lea.vmem [#allocation2], %s360
          %362 = dma.done %s358, 1536
        $region40: #{tpu_custom_call.1} parent=35 // pred_fallthru
          _
      $region36: #{tpu_custom_call.1} parent=5 // pred_fallthru
        _
    $region6: #{tpu_custom_call.1} parent=1 // loop_footer
      %s15 = sadd.s32 1, %s11
    $region7: #{tpu_custom_call.1} parent=1 // loop_footer_branch
      %10 = sbr.rel target = $region3
    $region8: #{tpu_custom_call.1} parent=1 // loop_exit
      _
    %363 = vsyncpa [#allocation3], 1
    %s364 = scalar_lea.sflag [#allocation3], 1
    %365 = vsyncpa %s364, 1

</llo_original>
